<compile_context>
chip_gen: v7x
topology: tpu7x:2x2x1
jax: 0.10.0
libtpu: 0.0.40
codegen_flags: <defaults>
</compile_context>

<pallas_src>
import functools

import jax
import jax.numpy as jnp
from jax.experimental import pallas as pl
from jax.experimental.pallas import tpu as pltpu

IN_DIM = 2304        # 18 * 128  (concat of two 1152-d feature embeddings)
HIDDEN = 256         # 2 * 128
ACTION_SZ = 12
ACTION_PAD = 128     # lane-dense padded output width


def _round_up(x, m):
    return ((x + m - 1) // m) * m


# ----------------------------- kernels ------------------------------------ #

def _inverse_kernel_fused(x_ref, wf_ref, bf_ref, o_ref):
    # x_ref: (tm, IN_DIM) f32 ; wf_ref: (IN_DIM, ACTION_PAD) bf16 ; bf_ref: (1, ACTION_PAD) f32
    xb = x_ref[...].astype(jnp.bfloat16)            # in-kernel cast: VPU filler, no extra HBM pass
    o = jnp.dot(xb, wf_ref[...], preferred_element_type=jnp.float32)
    o_ref[...] = (o + bf_ref[...]).astype(o_ref.dtype)


def _inverse_kernel_2layer(x_ref, w1_ref, b1_ref, w2_ref, b2_ref, o_ref):
    xb = x_ref[...].astype(jnp.bfloat16)
    h = jnp.dot(xb, w1_ref[...], preferred_element_type=jnp.float32) + b1_ref[...]
    o = jnp.dot(h.astype(jnp.bfloat16), w2_ref[...], preferred_element_type=jnp.float32)
    o_ref[...] = (o + b2_ref[...]).astype(o_ref.dtype)


# ----------------------------- wrapper ------------------------------------ #

@functools.partial(jax.jit, static_argnames=("tm", "fused"))
def inverse_model_pallas(x, params, *, tm=512, fused=True):
    """x: (B, 2304) float32. Returns (B, ACTION_SZ) float32 logits.

    tm tuning notes: 512 is safe and near roofline on every generation
    (fits v5e's 16 MiB scoped-VMEM default with f32 x). On v6e (128 MiB VMEM)
    tm can be pushed to 2048 for large-batch training; on v7x keep
    tm <= 1024 and >=2 grid steps (done automatically below) for megacore.
    """
    B = x.shape[0]

    # --- tile selection (static under jit) ---
    tm_eff = min(tm, B)
    if B > 256:
        # Ensure >=2 grid steps so the "parallel" axis lands work on both
        # v7x TensorCores for mid-size batches.
        tm_eff = min(tm_eff, max(256, _round_up(-(-B // 2), 256)))
    nb = pl.cdiv(B, tm_eff)

    # --- VMEM budget derived from the actual tile footprint (double-buffered) ---
    x_bytes = tm_eff * IN_DIM * 4
    o_bytes = tm_eff * ACTION_PAD * 4
    w_bytes = (IN_DIM * ACTION_PAD * 2) if fused else (
        IN_DIM * HIDDEN * 2 + HIDDEN * ACTION_PAD * 2)
    vmem_limit = max(2 * (x_bytes + o_bytes + w_bytes) + (2 << 20), 8 << 20)

    flops = 2 * B * (IN_DIM * ACTION_PAD if fused
                     else (IN_DIM * HIDDEN + HIDDEN * ACTION_PAD))
    cost = pl.CostEstimate(
        flops=flops,
        transcendentals=0,
        bytes_accessed=B * IN_DIM * 4 + B * ACTION_PAD * 4 + w_bytes,
    )

    if fused:
        wf, bf = params
        kernel = _inverse_kernel_fused
        in_specs = [
            pl.BlockSpec((tm_eff, IN_DIM), lambda m: (m, 0)),        # x tile (f32)
            pl.BlockSpec((IN_DIM, ACTION_PAD), lambda m: (0, 0)),    # Wf (VMEM-resident)
            pl.BlockSpec((1, ACTION_PAD), lambda m: (0, 0)),         # bf
        ]
        args = (x, wf, bf)
    else:
        w1, b1, w2p, b2p = params
        kernel = _inverse_kernel_2layer
        in_specs = [
            pl.BlockSpec((tm_eff, IN_DIM), lambda m: (m, 0)),        # x tile (f32)
            pl.BlockSpec((IN_DIM, HIDDEN), lambda m: (0, 0)),        # W1 (VMEM-resident)
            pl.BlockSpec((1, HIDDEN), lambda m: (0, 0)),             # b1
            pl.BlockSpec((HIDDEN, ACTION_PAD), lambda m: (0, 0)),    # W2 (VMEM-resident)
            pl.BlockSpec((1, ACTION_PAD), lambda m: (0, 0)),         # b2
        ]
        args = (x, w1, b1, w2p, b2p)

    out = pl.pallas_call(
        kernel,
        # No batch padding: last block may be ragged; Pallas masks the partial
        # input copy / output store. Garbage rows never reach the final output.
        out_shape=jax.ShapeDtypeStruct((B, ACTION_PAD), jnp.float32),
        grid=(nb,),
        in_specs=in_specs,
        out_specs=pl.BlockSpec((tm_eff, ACTION_PAD), lambda m: (m, 0)),
        compiler_params=pltpu.CompilerParams(
            dimension_semantics=("parallel",),
            vmem_limit_bytes=vmem_limit,
        ),
        cost_estimate=cost,
    )(*args)

    return out[:, :ACTION_SZ]


# --------------------------- parameter prep -------------------------------- #

def init_params(key, action_sz=ACTION_SZ):
    """PyTorch nn.Linear default init: U[-1/sqrt(fan_in), +1/sqrt(fan_in)].
    Returns raw f32 params with weights already transposed to (in, out)."""
    k1w, k1b, k2w, k2b = jax.random.split(key, 4)
    bnd1 = 1.0 / jnp.sqrt(IN_DIM)
    w1 = jax.random.uniform(k1w, (IN_DIM, HIDDEN), jnp.float32, -bnd1, bnd1)
    b1 = jax.random.uniform(k1b, (HIDDEN,), jnp.float32, -bnd1, bnd1)
    bnd2 = 1.0 / jnp.sqrt(HIDDEN)
    w2 = jax.random.uniform(k2w, (HIDDEN, action_sz), jnp.float32, -bnd2, bnd2)
    b2 = jax.random.uniform(k2b, (action_sz,), jnp.float32, -bnd2, bnd2)
    return w1, b1, w2, b2


def pack_params_fused(raw):
    """Fold the two activation-free Linears into one affine map (f32, then bf16),
    zero-padded from action_sz to ACTION_PAD lanes."""
    w1, b1, w2, b2 = raw
    n = w2.shape[1]
    wf = w1 @ w2                       # (IN_DIM, n)  computed in f32
    bf = b1 @ w2 + b2                  # (n,)
    wf_p = jnp.zeros((IN_DIM, ACTION_PAD), jnp.float32).at[:, :n].set(wf)
    bf_p = jnp.zeros((1, ACTION_PAD), jnp.float32).at[:, :n].set(bf)
    return wf_p.astype(jnp.bfloat16), bf_p


def pack_params_2layer(raw):
    w1, b1, w2, b2 = raw
    n = w2.shape[1]
    w2p = jnp.zeros((HIDDEN, ACTION_PAD), jnp.float32).at[:, :n].set(w2)
    b2p = jnp.zeros((1, ACTION_PAD), jnp.float32).at[:, :n].set(b2)
    return (w1.astype(jnp.bfloat16), b1.reshape(1, HIDDEN),
            w2p.astype(jnp.bfloat16), b2p)


def inverse_model_ref(x, raw):
    """Plain-JAX f32 reference matching the PyTorch module exactly."""
    w1, b1, w2, b2 = raw
    h = x @ w1 + b1
    return h @ w2 + b2


# --------------------------------- test ------------------------------------ #

if __name__ == "__main__":
    key = jax.random.PRNGKey(0)
    kp, kx1, kx2 = jax.random.split(key, 3)
    raw = init_params(kp)
    p_fused = pack_params_fused(raw)
    p_2layer = pack_params_2layer(raw)

    # batch=8: single tile. batch=260: multi-tile (tm_eff=256, nb=2) exercising
    # the ragged last block, weight residency across tiles, and megacore split.
    for kx, batch in ((kx1, 8), (kx2, 260)):
        x = jax.random.normal(kx, (batch, IN_DIM), jnp.float32)
        ref = inverse_model_ref(x, raw)
        for fused, p in ((True, p_fused), (False, p_2layer)):
            out = jax.block_until_ready(inverse_model_pallas(x, p, fused=fused))
            assert out.shape == (batch, ACTION_SZ)
            assert jnp.allclose(out, ref, atol=2e-2, rtol=2e-2), (
                f"mismatch vs reference (batch={batch}, fused={fused}), "
                f"max_abs_err={float(jnp.max(jnp.abs(out - ref)))}")

    print("KERNEL_OK")
</pallas_src>

<mosaic_0001>
module attributes {stable_mosaic.version = 11 : i64} {
  func.func @_inverse_kernel_fused(%arg0: i32, %arg1: memref<8x2304xf32, #tpu.memory_space<vmem>>, %arg2: memref<2304x128xbf16, #tpu.memory_space<vmem>>, %arg3: memref<1x128xf32, #tpu.memory_space<vmem>>, %arg4: memref<8x128xf32, #tpu.memory_space<vmem>>) attributes {dimension_semantics = [#tpu.dimension_semantics<parallel>], iteration_bounds = array<i64: 1>, scalar_prefetch = 0 : i64, scratch_operands = 0 : i64, tpu.core_type = #tpu.core_type<tc>, window_params = [{transform_indices = @transform_0, window_bounds = array<i64: 8, 2304>}, {pipeline_mode = #tpu.pipeline_mode<synchronous>, transform_indices = @transform_1, window_bounds = array<i64: 2304, 128>}, {pipeline_mode = #tpu.pipeline_mode<synchronous>, transform_indices = @transform_2, window_bounds = array<i64: 1, 128>}, {transform_indices = @transform_3, window_bounds = array<i64: 8, 128>}]} {
    %c0 = arith.constant 0 : index
    %c0_0 = arith.constant 0 : index
    %0 = vector.load %arg1[%c0, %c0_0] : memref<8x2304xf32, #tpu.memory_space<vmem>>, vector<8x2304xf32>
    %1 = arith.truncf %0 : vector<8x2304xf32> to vector<8x2304xbf16>
    %c0_1 = arith.constant 0 : index
    %c0_2 = arith.constant 0 : index
    %2 = vector.load %arg2[%c0_1, %c0_2] : memref<2304x128xbf16, #tpu.memory_space<vmem>>, vector<2304x128xbf16>
    %cst = arith.constant dense<0.000000e+00> : vector<8x128xf32>
    %3 = tpu.matmul %1, %2, %cst {dimension_numbers = #tpu.dot_dimension_numbers<[1], [0], [0], [1], [0, 0, 1, 1], [], []>} : vector<8x2304xbf16>, vector<2304x128xbf16>, vector<8x128xf32> -> vector<8x128xf32>
    %c0_3 = arith.constant 0 : index
    %c0_4 = arith.constant 0 : index
    %4 = vector.load %arg3[%c0_3, %c0_4] : memref<1x128xf32, #tpu.memory_space<vmem>>, vector<1x128xf32>
    %5 = vector.broadcast %4 : vector<1x128xf32> to vector<8x128xf32>
    %6 = arith.addf %3, %5 : vector<8x128xf32>
    %c0_5 = arith.constant 0 : index
    %c0_6 = arith.constant 0 : index
    %7 = vector.load %arg4[%c0_5, %c0_6] : memref<8x128xf32, #tpu.memory_space<vmem>>, vector<8x128xf32>
    tpu.vector_store %arg4[%c0_5, %c0_6], %6 {strides = array<i32>} : memref<8x128xf32, #tpu.memory_space<vmem>>, vector<8x128xf32>,
    return
  }
  func.func @transform_0(%arg0: i32) -> (i32, i32) {
    %c0_i32 = arith.constant 0 : i32
    %c0_i32_0 = arith.constant 0 : i32
    return %arg0, %c0_i32 : i32, i32
  }
  func.func @transform_1(%arg0: i32) -> (i32, i32) {
    %c0_i32 = arith.constant 0 : i32
    %c0_i32_0 = arith.constant 0 : i32
    %c0_i32_1 = arith.constant 0 : i32
    return %c0_i32, %c0_i32_0 : i32, i32
  }
  func.func @transform_2(%arg0: i32) -> (i32, i32) {
    %c0_i32 = arith.constant 0 : i32
    %c0_i32_0 = arith.constant 0 : i32
    %c0_i32_1 = arith.constant 0 : i32
    return %c0_i32, %c0_i32_0 : i32, i32
  }
  func.func @transform_3(%arg0: i32) -> (i32, i32) {
    %c0_i32 = arith.constant 0 : i32
    %c0_i32_0 = arith.constant 0 : i32
    return %arg0, %c0_i32 : i32, i32
  }
}

</mosaic_0001>

<llo_original>
// kernel: inverse_model_pallas.1
$region0: #{inverse_model_pallas.1}
  #allocation0 [shape = 'u32[]', space=smem, size = 0x4, offset = 0x4, fixed_abs, tag = 'smem constant byte address 0x4 - core index']
  #allocation1 [shape = 'u32[144,128]{1,0:T(1,128)}', space=vmem, size = 0x12000, scoped, tag = 'internal scratch']
  %s0 = inlined_call_operand.hbm [shape: f32[8,2304], index: 0, kind: input, shape index: {}]
  %s1 = inlined_call_operand.hbm [shape: bf16[2304,128], index: 1, kind: input, shape index: {}]
  %s2 = inlined_call_operand.vmem [shape: f32[1,128], index: 2, kind: input, shape index: {}]
  %s3 = inlined_call_operand.hbm [shape: f32[8,128], index: 3, kind: output, shape index: {}]
  %s4 = sld [smem:[#allocation0]]
  $region30: #{inverse_model_pallas.1} parent=0
    _
  %s6 = ssub.s32 1, %s4
  %s7 = scalar_select 0, %s6, %s4
  $region1: #{inverse_model_pallas.1} parent=0
    #allocation2 [shape = 'u8[73728]{0}', space=vmem, size = 0x12000, scoped, tag = 'input window, operand 0, single buffered']
    #allocation3 [shape = 's32[1]{0}', space=sflag, size = 0x4, scoped, tag = 'scoped memory for inverse_model_pallas.1']
    #allocation4 [shape = 's32[1]{0}', space=sflag, size = 0x4, scoped, tag = 'scoped memory for inverse_model_pallas.1']
    #allocation5 [shape = 'u8[589824]{0}', space=vmem, size = 0x90000, scoped, tag = 'input window, operand 1, single buffered']
    #allocation6 [shape = 's32[1]{0}', space=sflag, size = 0x4, scoped, tag = 'scoped memory for inverse_model_pallas.1']
    #allocation7 [shape = 'u8[4096]{0}', space=vmem, size = 0x1000, scoped, tag = 'output window, operand 0, single buffered']
    %8 = vsyncpa [#allocation3], 0
    %9 = vsyncpa [#allocation6], 0
    %10 = vsyncpa [#allocation4], 0
    // Predicated region
    $region2: #{inverse_model_pallas.1} parent=1 // pred_check
      _
    $region3: #{inverse_model_pallas.1} parent=1 // pred_check_branch
      %12 = sbr.rel (0) target = $region5
    $region4: #{inverse_model_pallas.1} parent=1 // pred_region
      %s14 = ssub.s32 2304, 2304
      %15 = vsyncadd [#allocation3], %s14
      %s17 = sshll.u32 [#allocation2], 4
      %s18 = int_to_ptr.vmem [resolvable:$true] %s17
      %20 = dma.hbm_to_vmem [thread:$0]  %s0, 2304, %s18, [#allocation3]
    $region5: #{inverse_model_pallas.1} parent=1 // pred_fallthru
      _
    // Predicated region
    $region6: #{inverse_model_pallas.1} parent=1 // pred_check
      _
    $region7: #{inverse_model_pallas.1} parent=1 // pred_check_branch
      %22 = sbr.rel (0) target = $region9
    $region8: #{inverse_model_pallas.1} parent=1 // pred_region
      %s24 = ssub.s32 18432, 18432
      %25 = vsyncadd [#allocation6], %s24
      %s26 = sshll.u32 [#allocation5], 4
      %s27 = int_to_ptr.vmem [resolvable:$true] %s26
      %32 = dma.hbm_to_vmem [thread:$0]  %s1, 18432, %s27, [#allocation6], 64, 64, 4
    $region9: #{inverse_model_pallas.1} parent=1 // pred_fallthru
      _
    // Predicated region
    $region10: #{inverse_model_pallas.1} parent=1 // pred_check
      _
    $region11: #{inverse_model_pallas.1} parent=1 // pred_check_branch
      %34 = sbr.rel (0) target = $region13
    $region12: #{inverse_model_pallas.1} parent=1 // pred_region
      _
    $region13: #{inverse_model_pallas.1} parent=1 // pred_fallthru
      _
    // Predicated region
    $region14: #{inverse_model_pallas.1} parent=1 // pred_check
      _
    $region15: #{inverse_model_pallas.1} parent=1 // pred_check_branch
      %36 = sbr.rel (0) target = $region17
    $region16: #{inverse_model_pallas.1} parent=1 // pred_region
      %37 = dma.done [#allocation3], 2304
    $region17: #{inverse_model_pallas.1} parent=1 // pred_fallthru
      _
    // Predicated region
    $region18: #{inverse_model_pallas.1} parent=1 // pred_check
      _
    $region19: #{inverse_model_pallas.1} parent=1 // pred_check_branch
      %39 = sbr.rel (0) target = $region21
    $region20: #{inverse_model_pallas.1} parent=1 // pred_region
      %40 = dma.done [#allocation6], 18432
    $region21: #{inverse_model_pallas.1} parent=1 // pred_fallthru
      _
    %v42 = vld [vmem:[#allocation2] sm:$0xff]
    %v43 = vld [vmem:[#allocation2 + $0x8] sm:$0xff]
    %v44 = vld [vmem:[#allocation2 + $0x10] sm:$0xff]
    %v45 = vld [vmem:[#allocation2 + $0x18] sm:$0xff]
    %v46 = vld [vmem:[#allocation2 + $0x20] sm:$0xff]
    %v47 = vld [vmem:[#allocation2 + $0x28] sm:$0xff]
    %v48 = vld [vmem:[#allocation2 + $0x30] sm:$0xff]
    %v49 = vld [vmem:[#allocation2 + $0x38] sm:$0xff]
    %v50 = vld [vmem:[#allocation2 + $0x40] sm:$0xff]
    %v51 = vld [vmem:[#allocation2 + $0x48] sm:$0xff]
    %v52 = vld [vmem:[#allocation2 + $0x50] sm:$0xff]
    %v53 = vld [vmem:[#allocation2 + $0x58] sm:$0xff]
    %v54 = vld [vmem:[#allocation2 + $0x60] sm:$0xff]
    %v55 = vld [vmem:[#allocation2 + $0x68] sm:$0xff]
    %v56 = vld [vmem:[#allocation2 + $0x70] sm:$0xff]
    %v57 = vld [vmem:[#allocation2 + $0x78] sm:$0xff]
    %v58 = vld [vmem:[#allocation2 + $0x80] sm:$0xff]
    %v59 = vld [vmem:[#allocation2 + $0x88] sm:$0xff]
    %v60 = vpack.c.bf16 %v42, %v42
    %v61 = vpack.c.bf16 %v43, %v43
    %v62 = vpack.c.bf16 %v44, %v44
    %v63 = vpack.c.bf16 %v45, %v45
    %v64 = vpack.c.bf16 %v46, %v46
    %v65 = vpack.c.bf16 %v47, %v47
    %v66 = vpack.c.bf16 %v48, %v48
    %v67 = vpack.c.bf16 %v49, %v49
    %v68 = vpack.c.bf16 %v50, %v50
    %v69 = vpack.c.bf16 %v51, %v51
    %v70 = vpack.c.bf16 %v52, %v52
    %v71 = vpack.c.bf16 %v53, %v53
    %v72 = vpack.c.bf16 %v54, %v54
    %v73 = vpack.c.bf16 %v55, %v55
    %v74 = vpack.c.bf16 %v56, %v56
    %v75 = vpack.c.bf16 %v57, %v57
    %v76 = vpack.c.bf16 %v58, %v58
    %v77 = vpack.c.bf16 %v59, %v59
    %v78 = vld [vmem:[#allocation5] sm:$0xf]
    %v79 = vld [vmem:[#allocation5 + $0x4] sm:$0xf]
    %v80 = vld [vmem:[#allocation5 + $0x8] sm:$0xf]
    %v81 = vld [vmem:[#allocation5 + $0xc] sm:$0xf]
    %v82 = vld [vmem:[#allocation5 + $0x10] sm:$0xf]
    %v83 = vld [vmem:[#allocation5 + $0x14] sm:$0xf]
    %v84 = vld [vmem:[#allocation5 + $0x18] sm:$0xf]
    %v85 = vld [vmem:[#allocation5 + $0x1c] sm:$0xf]
    %v86 = vld [vmem:[#allocation5 + $0x20] sm:$0xf]
    %v87 = vld [vmem:[#allocation5 + $0x24] sm:$0xf]
    %v88 = vld [vmem:[#allocation5 + $0x28] sm:$0xf]
    %v89 = vld [vmem:[#allocation5 + $0x2c] sm:$0xf]
    %v90 = vld [vmem:[#allocation5 + $0x30] sm:$0xf]
    %v91 = vld [vmem:[#allocation5 + $0x34] sm:$0xf]
    %v92 = vld [vmem:[#allocation5 + $0x38] sm:$0xf]
    %v93 = vld [vmem:[#allocation5 + $0x3c] sm:$0xf]
    %v94 = vld [vmem:[#allocation5 + $0x40] sm:$0xf]
    %v95 = vld [vmem:[#allocation5 + $0x44] sm:$0xf]
    %v96 = vld [vmem:[#allocation5 + $0x48] sm:$0xf]
    %v97 = vld [vmem:[#allocation5 + $0x4c] sm:$0xf]
    %v98 = vld [vmem:[#allocation5 + $0x50] sm:$0xf]
    %v99 = vld [vmem:[#allocation5 + $0x54] sm:$0xf]
    %v100 = vld [vmem:[#allocation5 + $0x58] sm:$0xf]
    %v101 = vld [vmem:[#allocation5 + $0x5c] sm:$0xf]
    %v102 = vld [vmem:[#allocation5 + $0x60] sm:$0xf]
    %v103 = vld [vmem:[#allocation5 + $0x64] sm:$0xf]
    %v104 = vld [vmem:[#allocation5 + $0x68] sm:$0xf]
    %v105 = vld [vmem:[#allocation5 + $0x6c] sm:$0xf]
    %v106 = vld [vmem:[#allocation5 + $0x70] sm:$0xf]
    %v107 = vld [vmem:[#allocation5 + $0x74] sm:$0xf]
    %v108 = vld [vmem:[#allocation5 + $0x78] sm:$0xf]
    %v109 = vld [vmem:[#allocation5 + $0x7c] sm:$0xf]
    %v110 = vld [vmem:[#allocation5 + $0x80] sm:$0xf]
    %v111 = vld [vmem:[#allocation5 + $0x84] sm:$0xf]
    %v112 = vld [vmem:[#allocation5 + $0x88] sm:$0xf]
    %v113 = vld [vmem:[#allocation5 + $0x8c] sm:$0xf]
    %v114 = vld [vmem:[#allocation5 + $0x90] sm:$0xf]
    %v115 = vld [vmem:[#allocation5 + $0x94] sm:$0xf]
    %v116 = vld [vmem:[#allocation5 + $0x98] sm:$0xf]
    %v117 = vld [vmem:[#allocation5 + $0x9c] sm:$0xf]
    %v118 = vld [vmem:[#allocation5 + $0xa0] sm:$0xf]
    %v119 = vld [vmem:[#allocation5 + $0xa4] sm:$0xf]
    %v120 = vld [vmem:[#allocation5 + $0xa8] sm:$0xf]
    %v121 = vld [vmem:[#allocation5 + $0xac] sm:$0xf]
    %v122 = vld [vmem:[#allocation5 + $0xb0] sm:$0xf]
    %v123 = vld [vmem:[#allocation5 + $0xb4] sm:$0xf]
    %v124 = vld [vmem:[#allocation5 + $0xb8] sm:$0xf]
    %v125 = vld [vmem:[#allocation5 + $0xbc] sm:$0xf]
    %v126 = vld [vmem:[#allocation5 + $0xc0] sm:$0xf]
    %v127 = vld [vmem:[#allocation5 + $0xc4] sm:$0xf]
    %v128 = vld [vmem:[#allocation5 + $0xc8] sm:$0xf]
    %v129 = vld [vmem:[#allocation5 + $0xcc] sm:$0xf]
    %v130 = vld [vmem:[#allocation5 + $0xd0] sm:$0xf]
    %v131 = vld [vmem:[#allocation5 + $0xd4] sm:$0xf]
    %v132 = vld [vmem:[#allocation5 + $0xd8] sm:$0xf]
    %v133 = vld [vmem:[#allocation5 + $0xdc] sm:$0xf]
    %v134 = vld [vmem:[#allocation5 + $0xe0] sm:$0xf]
    %v135 = vld [vmem:[#allocation5 + $0xe4] sm:$0xf]
    %v136 = vld [vmem:[#allocation5 + $0xe8] sm:$0xf]
    %v137 = vld [vmem:[#allocation5 + $0xec] sm:$0xf]
    %v138 = vld [vmem:[#allocation5 + $0xf0] sm:$0xf]
    %v139 = vld [vmem:[#allocation5 + $0xf4] sm:$0xf]
    %v140 = vld [vmem:[#allocation5 + $0xf8] sm:$0xf]
    %v141 = vld [vmem:[#allocation5 + $0xfc] sm:$0xf]
    %v142 = vld [vmem:[#allocation5 + $0x100] sm:$0xf]
    %v143 = vld [vmem:[#allocation5 + $0x104] sm:$0xf]
    %v144 = vld [vmem:[#allocation5 + $0x108] sm:$0xf]
    %v145 = vld [vmem:[#allocation5 + $0x10c] sm:$0xf]
    %v146 = vld [vmem:[#allocation5 + $0x110] sm:$0xf]
    %v147 = vld [vmem:[#allocation5 + $0x114] sm:$0xf]
    %v148 = vld [vmem:[#allocation5 + $0x118] sm:$0xf]
    %v149 = vld [vmem:[#allocation5 + $0x11c] sm:$0xf]
    %v150 = vld [vmem:[#allocation5 + $0x120] sm:$0xf]
    %v151 = vld [vmem:[#allocation5 + $0x124] sm:$0xf]
    %v152 = vld [vmem:[#allocation5 + $0x128] sm:$0xf]
    %v153 = vld [vmem:[#allocation5 + $0x12c] sm:$0xf]
    %v154 = vld [vmem:[#allocation5 + $0x130] sm:$0xf]
    %v155 = vld [vmem:[#allocation5 + $0x134] sm:$0xf]
    %v156 = vld [vmem:[#allocation5 + $0x138] sm:$0xf]
    %v157 = vld [vmem:[#allocation5 + $0x13c] sm:$0xf]
    %v158 = vld [vmem:[#allocation5 + $0x140] sm:$0xf]
    %v159 = vld [vmem:[#allocation5 + $0x144] sm:$0xf]
    %v160 = vld [vmem:[#allocation5 + $0x148] sm:$0xf]
    %v161 = vld [vmem:[#allocation5 + $0x14c] sm:$0xf]
    %v162 = vld [vmem:[#allocation5 + $0x150] sm:$0xf]
    %v163 = vld [vmem:[#allocation5 + $0x154] sm:$0xf]
    %v164 = vld [vmem:[#allocation5 + $0x158] sm:$0xf]
    %v165 = vld [vmem:[#allocation5 + $0x15c] sm:$0xf]
    %v166 = vld [vmem:[#allocation5 + $0x160] sm:$0xf]
    %v167 = vld [vmem:[#allocation5 + $0x164] sm:$0xf]
    %v168 = vld [vmem:[#allocation5 + $0x168] sm:$0xf]
    %v169 = vld [vmem:[#allocation5 + $0x16c] sm:$0xf]
    %v170 = vld [vmem:[#allocation5 + $0x170] sm:$0xf]
    %v171 = vld [vmem:[#allocation5 + $0x174] sm:$0xf]
    %v172 = vld [vmem:[#allocation5 + $0x178] sm:$0xf]
    %v173 = vld [vmem:[#allocation5 + $0x17c] sm:$0xf]
    %v174 = vld [vmem:[#allocation5 + $0x180] sm:$0xf]
    %v175 = vld [vmem:[#allocation5 + $0x184] sm:$0xf]
    %v176 = vld [vmem:[#allocation5 + $0x188] sm:$0xf]
    %v177 = vld [vmem:[#allocation5 + $0x18c] sm:$0xf]
    %v178 = vld [vmem:[#allocation5 + $0x190] sm:$0xf]
    %v179 = vld [vmem:[#allocation5 + $0x194] sm:$0xf]
    %v180 = vld [vmem:[#allocation5 + $0x198] sm:$0xf]
    %v181 = vld [vmem:[#allocation5 + $0x19c] sm:$0xf]
    %v182 = vld [vmem:[#allocation5 + $0x1a0] sm:$0xf]
    %v183 = vld [vmem:[#allocation5 + $0x1a4] sm:$0xf]
    %v184 = vld [vmem:[#allocation5 + $0x1a8] sm:$0xf]
    %v185 = vld [vmem:[#allocation5 + $0x1ac] sm:$0xf]
    %v186 = vld [vmem:[#allocation5 + $0x1b0] sm:$0xf]
    %v187 = vld [vmem:[#allocation5 + $0x1b4] sm:$0xf]
    %v188 = vld [vmem:[#allocation5 + $0x1b8] sm:$0xf]
    %v189 = vld [vmem:[#allocation5 + $0x1bc] sm:$0xf]
    %v190 = vld [vmem:[#allocation5 + $0x1c0] sm:$0xf]
    %v191 = vld [vmem:[#allocation5 + $0x1c4] sm:$0xf]
    %v192 = vld [vmem:[#allocation5 + $0x1c8] sm:$0xf]
    %v193 = vld [vmem:[#allocation5 + $0x1cc] sm:$0xf]
    %v194 = vld [vmem:[#allocation5 + $0x1d0] sm:$0xf]
    %v195 = vld [vmem:[#allocation5 + $0x1d4] sm:$0xf]
    %v196 = vld [vmem:[#allocation5 + $0x1d8] sm:$0xf]
    %v197 = vld [vmem:[#allocation5 + $0x1dc] sm:$0xf]
    %v198 = vld [vmem:[#allocation5 + $0x1e0] sm:$0xf]
    %v199 = vld [vmem:[#allocation5 + $0x1e4] sm:$0xf]
    %v200 = vld [vmem:[#allocation5 + $0x1e8] sm:$0xf]
    %v201 = vld [vmem:[#allocation5 + $0x1ec] sm:$0xf]
    %v202 = vld [vmem:[#allocation5 + $0x1f0] sm:$0xf]
    %v203 = vld [vmem:[#allocation5 + $0x1f4] sm:$0xf]
    %v204 = vld [vmem:[#allocation5 + $0x1f8] sm:$0xf]
    %v205 = vld [vmem:[#allocation5 + $0x1fc] sm:$0xf]
    %v206 = vld [vmem:[#allocation5 + $0x200] sm:$0xf]
    %v207 = vld [vmem:[#allocation5 + $0x204] sm:$0xf]
    %v208 = vld [vmem:[#allocation5 + $0x208] sm:$0xf]
    %v209 = vld [vmem:[#allocation5 + $0x20c] sm:$0xf]
    %v210 = vld [vmem:[#allocation5 + $0x210] sm:$0xf]
    %v211 = vld [vmem:[#allocation5 + $0x214] sm:$0xf]
    %v212 = vld [vmem:[#allocation5 + $0x218] sm:$0xf]
    %v213 = vld [vmem:[#allocation5 + $0x21c] sm:$0xf]
    %v214 = vld [vmem:[#allocation5 + $0x220] sm:$0xf]
    %v215 = vld [vmem:[#allocation5 + $0x224] sm:$0xf]
    %v216 = vld [vmem:[#allocation5 + $0x228] sm:$0xf]
    %v217 = vld [vmem:[#allocation5 + $0x22c] sm:$0xf]
    %v218 = vld [vmem:[#allocation5 + $0x230] sm:$0xf]
    %v219 = vld [vmem:[#allocation5 + $0x234] sm:$0xf]
    %v220 = vld [vmem:[#allocation5 + $0x238] sm:$0xf]
    %v221 = vld [vmem:[#allocation5 + $0x23c] sm:$0xf]
    %v222 = vld [vmem:[#allocation5 + $0x240] sm:$0xf]
    %v223 = vld [vmem:[#allocation5 + $0x244] sm:$0xf]
    %v224 = vld [vmem:[#allocation5 + $0x248] sm:$0xf]
    %v225 = vld [vmem:[#allocation5 + $0x24c] sm:$0xf]
    %v226 = vld [vmem:[#allocation5 + $0x250] sm:$0xf]
    %v227 = vld [vmem:[#allocation5 + $0x254] sm:$0xf]
    %v228 = vld [vmem:[#allocation5 + $0x258] sm:$0xf]
    %v229 = vld [vmem:[#allocation5 + $0x25c] sm:$0xf]
    %v230 = vld [vmem:[#allocation5 + $0x260] sm:$0xf]
    %v231 = vld [vmem:[#allocation5 + $0x264] sm:$0xf]
    %v232 = vld [vmem:[#allocation5 + $0x268] sm:$0xf]
    %v233 = vld [vmem:[#allocation5 + $0x26c] sm:$0xf]
    %v234 = vld [vmem:[#allocation5 + $0x270] sm:$0xf]
    %v235 = vld [vmem:[#allocation5 + $0x274] sm:$0xf]
    %v236 = vld [vmem:[#allocation5 + $0x278] sm:$0xf]
    %v237 = vld [vmem:[#allocation5 + $0x27c] sm:$0xf]
    %v238 = vld [vmem:[#allocation5 + $0x280] sm:$0xf]
    %v239 = vld [vmem:[#allocation5 + $0x284] sm:$0xf]
    %v240 = vld [vmem:[#allocation5 + $0x288] sm:$0xf]
    %v241 = vld [vmem:[#allocation5 + $0x28c] sm:$0xf]
    %v242 = vld [vmem:[#allocation5 + $0x290] sm:$0xf]
    %v243 = vld [vmem:[#allocation5 + $0x294] sm:$0xf]
    %v244 = vld [vmem:[#allocation5 + $0x298] sm:$0xf]
    %v245 = vld [vmem:[#allocation5 + $0x29c] sm:$0xf]
    %v246 = vld [vmem:[#allocation5 + $0x2a0] sm:$0xf]
    %v247 = vld [vmem:[#allocation5 + $0x2a4] sm:$0xf]
    %v248 = vld [vmem:[#allocation5 + $0x2a8] sm:$0xf]
    %v249 = vld [vmem:[#allocation5 + $0x2ac] sm:$0xf]
    %v250 = vld [vmem:[#allocation5 + $0x2b0] sm:$0xf]
    %v251 = vld [vmem:[#allocation5 + $0x2b4] sm:$0xf]
    %v252 = vld [vmem:[#allocation5 + $0x2b8] sm:$0xf]
    %v253 = vld [vmem:[#allocation5 + $0x2bc] sm:$0xf]
    %v254 = vld [vmem:[#allocation5 + $0x2c0] sm:$0xf]
    %v255 = vld [vmem:[#allocation5 + $0x2c4] sm:$0xf]
    %v256 = vld [vmem:[#allocation5 + $0x2c8] sm:$0xf]
    %v257 = vld [vmem:[#allocation5 + $0x2cc] sm:$0xf]
    %v258 = vld [vmem:[#allocation5 + $0x2d0] sm:$0xf]
    %v259 = vld [vmem:[#allocation5 + $0x2d4] sm:$0xf]
    %v260 = vld [vmem:[#allocation5 + $0x2d8] sm:$0xf]
    %v261 = vld [vmem:[#allocation5 + $0x2dc] sm:$0xf]
    %v262 = vld [vmem:[#allocation5 + $0x2e0] sm:$0xf]
    %v263 = vld [vmem:[#allocation5 + $0x2e4] sm:$0xf]
    %v264 = vld [vmem:[#allocation5 + $0x2e8] sm:$0xf]
    %v265 = vld [vmem:[#allocation5 + $0x2ec] sm:$0xf]
    %v266 = vld [vmem:[#allocation5 + $0x2f0] sm:$0xf]
    %v267 = vld [vmem:[#allocation5 + $0x2f4] sm:$0xf]
    %v268 = vld [vmem:[#allocation5 + $0x2f8] sm:$0xf]
    %v269 = vld [vmem:[#allocation5 + $0x2fc] sm:$0xf]
    %v270 = vld [vmem:[#allocation5 + $0x300] sm:$0xf]
    %v271 = vld [vmem:[#allocation5 + $0x304] sm:$0xf]
    %v272 = vld [vmem:[#allocation5 + $0x308] sm:$0xf]
    %v273 = vld [vmem:[#allocation5 + $0x30c] sm:$0xf]
    %v274 = vld [vmem:[#allocation5 + $0x310] sm:$0xf]
    %v275 = vld [vmem:[#allocation5 + $0x314] sm:$0xf]
    %v276 = vld [vmem:[#allocation5 + $0x318] sm:$0xf]
    %v277 = vld [vmem:[#allocation5 + $0x31c] sm:$0xf]
    %v278 = vld [vmem:[#allocation5 + $0x320] sm:$0xf]
    %v279 = vld [vmem:[#allocation5 + $0x324] sm:$0xf]
    %v280 = vld [vmem:[#allocation5 + $0x328] sm:$0xf]
    %v281 = vld [vmem:[#allocation5 + $0x32c] sm:$0xf]
    %v282 = vld [vmem:[#allocation5 + $0x330] sm:$0xf]
    %v283 = vld [vmem:[#allocation5 + $0x334] sm:$0xf]
    %v284 = vld [vmem:[#allocation5 + $0x338] sm:$0xf]
    %v285 = vld [vmem:[#allocation5 + $0x33c] sm:$0xf]
    %v286 = vld [vmem:[#allocation5 + $0x340] sm:$0xf]
    %v287 = vld [vmem:[#allocation5 + $0x344] sm:$0xf]
    %v288 = vld [vmem:[#allocation5 + $0x348] sm:$0xf]
    %v289 = vld [vmem:[#allocation5 + $0x34c] sm:$0xf]
    %v290 = vld [vmem:[#allocation5 + $0x350] sm:$0xf]
    %v291 = vld [vmem:[#allocation5 + $0x354] sm:$0xf]
    %v292 = vld [vmem:[#allocation5 + $0x358] sm:$0xf]
    %v293 = vld [vmem:[#allocation5 + $0x35c] sm:$0xf]
    %v294 = vld [vmem:[#allocation5 + $0x360] sm:$0xf]
    %v295 = vld [vmem:[#allocation5 + $0x364] sm:$0xf]
    %v296 = vld [vmem:[#allocation5 + $0x368] sm:$0xf]
    %v297 = vld [vmem:[#allocation5 + $0x36c] sm:$0xf]
    %v298 = vld [vmem:[#allocation5 + $0x370] sm:$0xf]
    %v299 = vld [vmem:[#allocation5 + $0x374] sm:$0xf]
    %v300 = vld [vmem:[#allocation5 + $0x378] sm:$0xf]
    %v301 = vld [vmem:[#allocation5 + $0x37c] sm:$0xf]
    %v302 = vld [vmem:[#allocation5 + $0x380] sm:$0xf]
    %v303 = vld [vmem:[#allocation5 + $0x384] sm:$0xf]
    %v304 = vld [vmem:[#allocation5 + $0x388] sm:$0xf]
    %v305 = vld [vmem:[#allocation5 + $0x38c] sm:$0xf]
    %v306 = vld [vmem:[#allocation5 + $0x390] sm:$0xf]
    %v307 = vld [vmem:[#allocation5 + $0x394] sm:$0xf]
    %v308 = vld [vmem:[#allocation5 + $0x398] sm:$0xf]
    %v309 = vld [vmem:[#allocation5 + $0x39c] sm:$0xf]
    %v310 = vld [vmem:[#allocation5 + $0x3a0] sm:$0xf]
    %v311 = vld [vmem:[#allocation5 + $0x3a4] sm:$0xf]
    %v312 = vld [vmem:[#allocation5 + $0x3a8] sm:$0xf]
    %v313 = vld [vmem:[#allocation5 + $0x3ac] sm:$0xf]
    %v314 = vld [vmem:[#allocation5 + $0x3b0] sm:$0xf]
    %v315 = vld [vmem:[#allocation5 + $0x3b4] sm:$0xf]
    %v316 = vld [vmem:[#allocation5 + $0x3b8] sm:$0xf]
    %v317 = vld [vmem:[#allocation5 + $0x3bc] sm:$0xf]
    %v318 = vld [vmem:[#allocation5 + $0x3c0] sm:$0xf]
    %v319 = vld [vmem:[#allocation5 + $0x3c4] sm:$0xf]
    %v320 = vld [vmem:[#allocation5 + $0x3c8] sm:$0xf]
    %v321 = vld [vmem:[#allocation5 + $0x3cc] sm:$0xf]
    %v322 = vld [vmem:[#allocation5 + $0x3d0] sm:$0xf]
    %v323 = vld [vmem:[#allocation5 + $0x3d4] sm:$0xf]
    %v324 = vld [vmem:[#allocation5 + $0x3d8] sm:$0xf]
    %v325 = vld [vmem:[#allocation5 + $0x3dc] sm:$0xf]
    %v326 = vld [vmem:[#allocation5 + $0x3e0] sm:$0xf]
    %v327 = vld [vmem:[#allocation5 + $0x3e4] sm:$0xf]
    %v328 = vld [vmem:[#allocation5 + $0x3e8] sm:$0xf]
    %v329 = vld [vmem:[#allocation5 + $0x3ec] sm:$0xf]
    %v330 = vld [vmem:[#allocation5 + $0x3f0] sm:$0xf]
    %v331 = vld [vmem:[#allocation5 + $0x3f4] sm:$0xf]
    %v332 = vld [vmem:[#allocation5 + $0x3f8] sm:$0xf]
    %v333 = vld [vmem:[#allocation5 + $0x3fc] sm:$0xf]
    %v334 = vld [vmem:[#allocation5 + $0x400] sm:$0xf]
    %v335 = vld [vmem:[#allocation5 + $0x404] sm:$0xf]
    %v336 = vld [vmem:[#allocation5 + $0x408] sm:$0xf]
    %v337 = vld [vmem:[#allocation5 + $0x40c] sm:$0xf]
    %v338 = vld [vmem:[#allocation5 + $0x410] sm:$0xf]
    %v339 = vld [vmem:[#allocation5 + $0x414] sm:$0xf]
    %v340 = vld [vmem:[#allocation5 + $0x418] sm:$0xf]
    %v341 = vld [vmem:[#allocation5 + $0x41c] sm:$0xf]
    %v342 = vld [vmem:[#allocation5 + $0x420] sm:$0xf]
    %v343 = vld [vmem:[#allocation5 + $0x424] sm:$0xf]
    %v344 = vld [vmem:[#allocation5 + $0x428] sm:$0xf]
    %v345 = vld [vmem:[#allocation5 + $0x42c] sm:$0xf]
    %v346 = vld [vmem:[#allocation5 + $0x430] sm:$0xf]
    %v347 = vld [vmem:[#allocation5 + $0x434] sm:$0xf]
    %v348 = vld [vmem:[#allocation5 + $0x438] sm:$0xf]
    %v349 = vld [vmem:[#allocation5 + $0x43c] sm:$0xf]
    %v350 = vld [vmem:[#allocation5 + $0x440] sm:$0xf]
    %v351 = vld [vmem:[#allocation5 + $0x444] sm:$0xf]
    %v352 = vld [vmem:[#allocation5 + $0x448] sm:$0xf]
    %v353 = vld [vmem:[#allocation5 + $0x44c] sm:$0xf]
    %v354 = vld [vmem:[#allocation5 + $0x450] sm:$0xf]
    %v355 = vld [vmem:[#allocation5 + $0x454] sm:$0xf]
    %v356 = vld [vmem:[#allocation5 + $0x458] sm:$0xf]
    %v357 = vld [vmem:[#allocation5 + $0x45c] sm:$0xf]
    %v358 = vld [vmem:[#allocation5 + $0x460] sm:$0xf]
    %v359 = vld [vmem:[#allocation5 + $0x464] sm:$0xf]
    %v360 = vld [vmem:[#allocation5 + $0x468] sm:$0xf]
    %v361 = vld [vmem:[#allocation5 + $0x46c] sm:$0xf]
    %v362 = vld [vmem:[#allocation5 + $0x470] sm:$0xf]
    %v363 = vld [vmem:[#allocation5 + $0x474] sm:$0xf]
    %v364 = vld [vmem:[#allocation5 + $0x478] sm:$0xf]
    %v365 = vld [vmem:[#allocation5 + $0x47c] sm:$0xf]
    %v366 = vld [vmem:[%s2] sm:$0x1]
    %v368 = vlaneseq
    %v369 = vshrl.u32 %v368, 7
    %v370 = vsub.s32 0, %v369
    %v371 = vrot.slane %v366, %v370
    %v661 = vunpack.c.l.b16 %v78
    %v662 = vunpack.c.l.b16 %v79
    %v663 = vunpack.c.l.b16 %v80
    %v664 = vunpack.c.l.b16 %v81
    %v665 = vunpack.c.l.b16 %v82
    %v666 = vunpack.c.l.b16 %v83
    %v667 = vunpack.c.l.b16 %v84
    %v668 = vunpack.c.l.b16 %v85
    %v669 = vunpack.c.l.b16 %v86
    %v670 = vunpack.c.l.b16 %v87
    %v671 = vunpack.c.l.b16 %v88
    %v672 = vunpack.c.l.b16 %v89
    %v673 = vunpack.c.l.b16 %v90
    %v674 = vunpack.c.l.b16 %v91
    %v675 = vunpack.c.l.b16 %v92
    %v676 = vunpack.c.l.b16 %v93
    %v677 = vunpack.c.l.b16 %v94
    %v678 = vunpack.c.l.b16 %v95
    %v679 = vunpack.c.l.b16 %v96
    %v680 = vunpack.c.l.b16 %v97
    %v681 = vunpack.c.l.b16 %v98
    %v682 = vunpack.c.l.b16 %v99
    %v683 = vunpack.c.l.b16 %v100
    %v684 = vunpack.c.l.b16 %v101
    %v685 = vunpack.c.l.b16 %v102
    %v686 = vunpack.c.l.b16 %v103
    %v687 = vunpack.c.l.b16 %v104
    %v688 = vunpack.c.l.b16 %v105
    %v689 = vunpack.c.l.b16 %v106
    %v690 = vunpack.c.l.b16 %v107
    %v691 = vunpack.c.l.b16 %v108
    %v692 = vunpack.c.l.b16 %v109
    %v693 = vunpack.c.l.b16 %v110
    %v694 = vunpack.c.l.b16 %v111
    %v695 = vunpack.c.l.b16 %v112
    %v696 = vunpack.c.l.b16 %v113
    %v697 = vunpack.c.l.b16 %v114
    %v698 = vunpack.c.l.b16 %v115
    %v699 = vunpack.c.l.b16 %v116
    %v700 = vunpack.c.l.b16 %v117
    %v701 = vunpack.c.l.b16 %v118
    %v702 = vunpack.c.l.b16 %v119
    %v703 = vunpack.c.l.b16 %v120
    %v704 = vunpack.c.l.b16 %v121
    %v705 = vunpack.c.l.b16 %v122
    %v706 = vunpack.c.l.b16 %v123
    %v707 = vunpack.c.l.b16 %v124
    %v708 = vunpack.c.l.b16 %v125
    %v709 = vunpack.c.l.b16 %v126
    %v710 = vunpack.c.l.b16 %v127
    %v711 = vunpack.c.l.b16 %v128
    %v712 = vunpack.c.l.b16 %v129
    %v713 = vunpack.c.l.b16 %v130
    %v714 = vunpack.c.l.b16 %v131
    %v715 = vunpack.c.l.b16 %v132
    %v716 = vunpack.c.l.b16 %v133
    %v717 = vunpack.c.l.b16 %v134
    %v718 = vunpack.c.l.b16 %v135
    %v719 = vunpack.c.l.b16 %v136
    %v720 = vunpack.c.l.b16 %v137
    %v721 = vunpack.c.l.b16 %v138
    %v722 = vunpack.c.l.b16 %v139
    %v723 = vunpack.c.l.b16 %v140
    %v724 = vunpack.c.l.b16 %v141
    %v725 = vunpack.c.l.b16 %v142
    %v726 = vunpack.c.l.b16 %v143
    %v727 = vunpack.c.l.b16 %v144
    %v728 = vunpack.c.l.b16 %v145
    %v729 = vunpack.c.l.b16 %v146
    %v730 = vunpack.c.l.b16 %v147
    %v731 = vunpack.c.l.b16 %v148
    %v732 = vunpack.c.l.b16 %v149
    %v733 = vunpack.c.l.b16 %v150
    %v734 = vunpack.c.l.b16 %v151
    %v735 = vunpack.c.l.b16 %v152
    %v736 = vunpack.c.l.b16 %v153
    %v737 = vunpack.c.l.b16 %v154
    %v738 = vunpack.c.l.b16 %v155
    %v739 = vunpack.c.l.b16 %v156
    %v740 = vunpack.c.l.b16 %v157
    %v741 = vunpack.c.l.b16 %v158
    %v742 = vunpack.c.l.b16 %v159
    %v743 = vunpack.c.l.b16 %v160
    %v744 = vunpack.c.l.b16 %v161
    %v745 = vunpack.c.l.b16 %v162
    %v746 = vunpack.c.l.b16 %v163
    %v747 = vunpack.c.l.b16 %v164
    %v748 = vunpack.c.l.b16 %v165
    %v749 = vunpack.c.l.b16 %v166
    %v750 = vunpack.c.l.b16 %v167
    %v751 = vunpack.c.l.b16 %v168
    %v752 = vunpack.c.l.b16 %v169
    %v753 = vunpack.c.l.b16 %v170
    %v754 = vunpack.c.l.b16 %v171
    %v755 = vunpack.c.l.b16 %v172
    %v756 = vunpack.c.l.b16 %v173
    %v757 = vunpack.c.l.b16 %v174
    %v758 = vunpack.c.l.b16 %v175
    %v759 = vunpack.c.l.b16 %v176
    %v760 = vunpack.c.l.b16 %v177
    %v761 = vunpack.c.l.b16 %v178
    %v762 = vunpack.c.l.b16 %v179
    %v763 = vunpack.c.l.b16 %v180
    %v764 = vunpack.c.l.b16 %v181
    %v765 = vunpack.c.l.b16 %v182
    %v766 = vunpack.c.l.b16 %v183
    %v767 = vunpack.c.l.b16 %v184
    %v768 = vunpack.c.l.b16 %v185
    %v769 = vunpack.c.l.b16 %v186
    %v770 = vunpack.c.l.b16 %v187
    %v771 = vunpack.c.l.b16 %v188
    %v772 = vunpack.c.l.b16 %v189
    %v773 = vunpack.c.l.b16 %v190
    %v774 = vunpack.c.l.b16 %v191
    %v775 = vunpack.c.l.b16 %v192
    %v776 = vunpack.c.l.b16 %v193
    %v777 = vunpack.c.l.b16 %v194
    %v778 = vunpack.c.l.b16 %v195
    %v779 = vunpack.c.l.b16 %v196
    %v780 = vunpack.c.l.b16 %v197
    %v781 = vunpack.c.l.b16 %v198
    %v782 = vunpack.c.l.b16 %v199
    %v783 = vunpack.c.l.b16 %v200
    %v784 = vunpack.c.l.b16 %v201
    %v785 = vunpack.c.l.b16 %v202
    %v786 = vunpack.c.l.b16 %v203
    %v787 = vunpack.c.l.b16 %v204
    %v788 = vunpack.c.l.b16 %v205
    %v789 = vunpack.c.l.b16 %v206
    %v790 = vunpack.c.l.b16 %v207
    %v791 = vunpack.c.l.b16 %v208
    %v792 = vunpack.c.l.b16 %v209
    %v793 = vunpack.c.l.b16 %v210
    %v794 = vunpack.c.l.b16 %v211
    %v795 = vunpack.c.l.b16 %v212
    %v796 = vunpack.c.l.b16 %v213
    %v797 = vunpack.c.l.b16 %v214
    %v798 = vunpack.c.l.b16 %v215
    %v799 = vunpack.c.l.b16 %v216
    %v800 = vunpack.c.l.b16 %v217
    %v801 = vunpack.c.l.b16 %v218
    %v802 = vunpack.c.l.b16 %v219
    %v803 = vunpack.c.l.b16 %v220
    %v804 = vunpack.c.l.b16 %v221
    %v805 = vunpack.c.l.b16 %v222
    %v806 = vunpack.c.l.b16 %v223
    %v807 = vunpack.c.l.b16 %v224
    %v808 = vunpack.c.l.b16 %v225
    %v809 = vunpack.c.l.b16 %v226
    %v810 = vunpack.c.l.b16 %v227
    %v811 = vunpack.c.l.b16 %v228
    %v812 = vunpack.c.l.b16 %v229
    %v813 = vunpack.c.l.b16 %v230
    %v814 = vunpack.c.l.b16 %v231
    %v815 = vunpack.c.l.b16 %v232
    %v816 = vunpack.c.l.b16 %v233
    %v817 = vunpack.c.l.b16 %v234
    %v818 = vunpack.c.l.b16 %v235
    %v819 = vunpack.c.l.b16 %v236
    %v820 = vunpack.c.l.b16 %v237
    %v821 = vunpack.c.l.b16 %v238
    %v822 = vunpack.c.l.b16 %v239
    %v823 = vunpack.c.l.b16 %v240
    %v824 = vunpack.c.l.b16 %v241
    %v825 = vunpack.c.l.b16 %v242
    %v826 = vunpack.c.l.b16 %v243
    %v827 = vunpack.c.l.b16 %v244
    %v828 = vunpack.c.l.b16 %v245
    %v829 = vunpack.c.l.b16 %v246
    %v830 = vunpack.c.l.b16 %v247
    %v831 = vunpack.c.l.b16 %v248
    %v832 = vunpack.c.l.b16 %v249
    %v833 = vunpack.c.l.b16 %v250
    %v834 = vunpack.c.l.b16 %v251
    %v835 = vunpack.c.l.b16 %v252
    %v836 = vunpack.c.l.b16 %v253
    %v837 = vunpack.c.l.b16 %v254
    %v838 = vunpack.c.l.b16 %v255
    %v839 = vunpack.c.l.b16 %v256
    %v840 = vunpack.c.l.b16 %v257
    %v841 = vunpack.c.l.b16 %v258
    %v842 = vunpack.c.l.b16 %v259
    %v843 = vunpack.c.l.b16 %v260
    %v844 = vunpack.c.l.b16 %v261
    %v845 = vunpack.c.l.b16 %v262
    %v846 = vunpack.c.l.b16 %v263
    %v847 = vunpack.c.l.b16 %v264
    %v848 = vunpack.c.l.b16 %v265
    %v849 = vunpack.c.l.b16 %v266
    %v850 = vunpack.c.l.b16 %v267
    %v851 = vunpack.c.l.b16 %v268
    %v852 = vunpack.c.l.b16 %v269
    %v853 = vunpack.c.l.b16 %v270
    %v854 = vunpack.c.l.b16 %v271
    %v855 = vunpack.c.l.b16 %v272
    %v856 = vunpack.c.l.b16 %v273
    %v857 = vunpack.c.l.b16 %v274
    %v858 = vunpack.c.l.b16 %v275
    %v859 = vunpack.c.l.b16 %v276
    %v860 = vunpack.c.l.b16 %v277
    %v861 = vunpack.c.l.b16 %v278
    %v862 = vunpack.c.l.b16 %v279
    %v863 = vunpack.c.l.b16 %v280
    %v864 = vunpack.c.l.b16 %v281
    %v865 = vunpack.c.l.b16 %v282
    %v866 = vunpack.c.l.b16 %v283
    %v867 = vunpack.c.l.b16 %v284
    %v868 = vunpack.c.l.b16 %v285
    %v869 = vunpack.c.l.b16 %v286
    %v870 = vunpack.c.l.b16 %v287
    %v871 = vunpack.c.l.b16 %v288
    %v872 = vunpack.c.l.b16 %v289
    %v873 = vunpack.c.l.b16 %v290
    %v874 = vunpack.c.l.b16 %v291
    %v875 = vunpack.c.l.b16 %v292
    %v876 = vunpack.c.l.b16 %v293
    %v877 = vunpack.c.l.b16 %v294
    %v878 = vunpack.c.l.b16 %v295
    %v879 = vunpack.c.l.b16 %v296
    %v880 = vunpack.c.l.b16 %v297
    %v881 = vunpack.c.l.b16 %v298
    %v882 = vunpack.c.l.b16 %v299
    %v883 = vunpack.c.l.b16 %v300
    %v884 = vunpack.c.l.b16 %v301
    %v885 = vunpack.c.l.b16 %v302
    %v886 = vunpack.c.l.b16 %v303
    %v887 = vunpack.c.l.b16 %v304
    %v888 = vunpack.c.l.b16 %v305
    %v889 = vunpack.c.l.b16 %v306
    %v890 = vunpack.c.l.b16 %v307
    %v891 = vunpack.c.l.b16 %v308
    %v892 = vunpack.c.l.b16 %v309
    %v893 = vunpack.c.l.b16 %v310
    %v894 = vunpack.c.l.b16 %v311
    %v895 = vunpack.c.l.b16 %v312
    %v896 = vunpack.c.l.b16 %v313
    %v897 = vunpack.c.l.b16 %v314
    %v898 = vunpack.c.l.b16 %v315
    %v899 = vunpack.c.l.b16 %v316
    %v900 = vunpack.c.l.b16 %v317
    %v901 = vunpack.c.l.b16 %v318
    %v902 = vunpack.c.l.b16 %v319
    %v903 = vunpack.c.l.b16 %v320
    %v904 = vunpack.c.l.b16 %v321
    %v905 = vunpack.c.l.b16 %v322
    %v906 = vunpack.c.l.b16 %v323
    %v907 = vunpack.c.l.b16 %v324
    %v908 = vunpack.c.l.b16 %v325
    %v909 = vunpack.c.l.b16 %v326
    %v910 = vunpack.c.l.b16 %v327
    %v911 = vunpack.c.l.b16 %v328
    %v912 = vunpack.c.l.b16 %v329
    %v913 = vunpack.c.l.b16 %v330
    %v914 = vunpack.c.l.b16 %v331
    %v915 = vunpack.c.l.b16 %v332
    %v916 = vunpack.c.l.b16 %v333
    %v917 = vunpack.c.l.b16 %v334
    %v918 = vunpack.c.l.b16 %v335
    %v919 = vunpack.c.l.b16 %v336
    %v920 = vunpack.c.l.b16 %v337
    %v921 = vunpack.c.l.b16 %v338
    %v922 = vunpack.c.l.b16 %v339
    %v923 = vunpack.c.l.b16 %v340
    %v924 = vunpack.c.l.b16 %v341
    %v925 = vunpack.c.l.b16 %v342
    %v926 = vunpack.c.l.b16 %v343
    %v927 = vunpack.c.l.b16 %v344
    %v928 = vunpack.c.l.b16 %v345
    %v929 = vunpack.c.l.b16 %v346
    %v930 = vunpack.c.l.b16 %v347
    %v931 = vunpack.c.l.b16 %v348
    %v932 = vunpack.c.l.b16 %v349
    %v933 = vunpack.c.l.b16 %v350
    %v934 = vunpack.c.l.b16 %v351
    %v935 = vunpack.c.l.b16 %v352
    %v936 = vunpack.c.l.b16 %v353
    %v937 = vunpack.c.l.b16 %v354
    %v938 = vunpack.c.l.b16 %v355
    %v939 = vunpack.c.l.b16 %v356
    %v940 = vunpack.c.l.b16 %v357
    %v941 = vunpack.c.l.b16 %v358
    %v942 = vunpack.c.l.b16 %v359
    %v943 = vunpack.c.l.b16 %v360
    %v944 = vunpack.c.l.b16 %v361
    %v945 = vunpack.c.l.b16 %v362
    %v946 = vunpack.c.l.b16 %v363
    %v947 = vunpack.c.l.b16 %v364
    %v948 = vunpack.c.l.b16 %v365
    %v949 = vpack.c.b16 %v662, %v661
    %v950 = vpack.c.b16 %v664, %v663
    %v951 = vpack.c.b16 %v666, %v665
    %v952 = vpack.c.b16 %v668, %v667
    %v953 = vpack.c.b16 %v670, %v669
    %v954 = vpack.c.b16 %v672, %v671
    %v955 = vpack.c.b16 %v674, %v673
    %v956 = vpack.c.b16 %v676, %v675
    %v957 = vpack.c.b16 %v678, %v677
    %v958 = vpack.c.b16 %v680, %v679
    %v959 = vpack.c.b16 %v682, %v681
    %v960 = vpack.c.b16 %v684, %v683
    %v961 = vpack.c.b16 %v686, %v685
    %v962 = vpack.c.b16 %v688, %v687
    %v963 = vpack.c.b16 %v690, %v689
    %v964 = vpack.c.b16 %v692, %v691
    %v965 = vpack.c.b16 %v694, %v693
    %v966 = vpack.c.b16 %v696, %v695
    %v967 = vpack.c.b16 %v698, %v697
    %v968 = vpack.c.b16 %v700, %v699
    %v969 = vpack.c.b16 %v702, %v701
    %v970 = vpack.c.b16 %v704, %v703
    %v971 = vpack.c.b16 %v706, %v705
    %v972 = vpack.c.b16 %v708, %v707
    %v973 = vpack.c.b16 %v710, %v709
    %v974 = vpack.c.b16 %v712, %v711
    %v975 = vpack.c.b16 %v714, %v713
    %v976 = vpack.c.b16 %v716, %v715
    %v977 = vpack.c.b16 %v718, %v717
    %v978 = vpack.c.b16 %v720, %v719
    %v979 = vpack.c.b16 %v722, %v721
    %v980 = vpack.c.b16 %v724, %v723
    %v981 = vpack.c.b16 %v726, %v725
    %v982 = vpack.c.b16 %v728, %v727
    %v983 = vpack.c.b16 %v730, %v729
    %v984 = vpack.c.b16 %v732, %v731
    %v985 = vpack.c.b16 %v734, %v733
    %v986 = vpack.c.b16 %v736, %v735
    %v987 = vpack.c.b16 %v738, %v737
    %v988 = vpack.c.b16 %v740, %v739
    %v989 = vpack.c.b16 %v742, %v741
    %v990 = vpack.c.b16 %v744, %v743
    %v991 = vpack.c.b16 %v746, %v745
    %v992 = vpack.c.b16 %v748, %v747
    %v993 = vpack.c.b16 %v750, %v749
    %v994 = vpack.c.b16 %v752, %v751
    %v995 = vpack.c.b16 %v754, %v753
    %v996 = vpack.c.b16 %v756, %v755
    %v997 = vpack.c.b16 %v758, %v757
    %v998 = vpack.c.b16 %v760, %v759
    %v999 = vpack.c.b16 %v762, %v761
    %v1000 = vpack.c.b16 %v764, %v763
    %v1001 = vpack.c.b16 %v766, %v765
    %v1002 = vpack.c.b16 %v768, %v767
    %v1003 = vpack.c.b16 %v770, %v769
    %v1004 = vpack.c.b16 %v772, %v771
    %v1005 = vpack.c.b16 %v774, %v773
    %v1006 = vpack.c.b16 %v776, %v775
    %v1007 = vpack.c.b16 %v778, %v777
    %v1008 = vpack.c.b16 %v780, %v779
    %v1009 = vpack.c.b16 %v782, %v781
    %v1010 = vpack.c.b16 %v784, %v783
    %v1011 = vpack.c.b16 %v786, %v785
    %v1012 = vpack.c.b16 %v788, %v787
    %v1013 = vpack.c.b16 %v790, %v789
    %v1014 = vpack.c.b16 %v792, %v791
    %v1015 = vpack.c.b16 %v794, %v793
    %v1016 = vpack.c.b16 %v796, %v795
    %v1017 = vpack.c.b16 %v798, %v797
    %v1018 = vpack.c.b16 %v800, %v799
    %v1019 = vpack.c.b16 %v802, %v801
    %v1020 = vpack.c.b16 %v804, %v803
    %v1021 = vpack.c.b16 %v806, %v805
    %v1022 = vpack.c.b16 %v808, %v807
    %v1023 = vpack.c.b16 %v810, %v809
    %v1024 = vpack.c.b16 %v812, %v811
    %v1025 = vpack.c.b16 %v814, %v813
    %v1026 = vpack.c.b16 %v816, %v815
    %v1027 = vpack.c.b16 %v818, %v817
    %v1028 = vpack.c.b16 %v820, %v819
    %v1029 = vpack.c.b16 %v822, %v821
    %v1030 = vpack.c.b16 %v824, %v823
    %v1031 = vpack.c.b16 %v826, %v825
    %v1032 = vpack.c.b16 %v828, %v827
    %v1033 = vpack.c.b16 %v830, %v829
    %v1034 = vpack.c.b16 %v832, %v831
    %v1035 = vpack.c.b16 %v834, %v833
    %v1036 = vpack.c.b16 %v836, %v835
    %v1037 = vpack.c.b16 %v838, %v837
    %v1038 = vpack.c.b16 %v840, %v839
    %v1039 = vpack.c.b16 %v842, %v841
    %v1040 = vpack.c.b16 %v844, %v843
    %v1041 = vpack.c.b16 %v846, %v845
    %v1042 = vpack.c.b16 %v848, %v847
    %v1043 = vpack.c.b16 %v850, %v849
    %v1044 = vpack.c.b16 %v852, %v851
    %v1045 = vpack.c.b16 %v854, %v853
    %v1046 = vpack.c.b16 %v856, %v855
    %v1047 = vpack.c.b16 %v858, %v857
    %v1048 = vpack.c.b16 %v860, %v859
    %v1049 = vpack.c.b16 %v862, %v861
    %v1050 = vpack.c.b16 %v864, %v863
    %v1051 = vpack.c.b16 %v866, %v865
    %v1052 = vpack.c.b16 %v868, %v867
    %v1053 = vpack.c.b16 %v870, %v869
    %v1054 = vpack.c.b16 %v872, %v871
    %v1055 = vpack.c.b16 %v874, %v873
    %v1056 = vpack.c.b16 %v876, %v875
    %v1057 = vpack.c.b16 %v878, %v877
    %v1058 = vpack.c.b16 %v880, %v879
    %v1059 = vpack.c.b16 %v882, %v881
    %v1060 = vpack.c.b16 %v884, %v883
    %v1061 = vpack.c.b16 %v886, %v885
    %v1062 = vpack.c.b16 %v888, %v887
    %v1063 = vpack.c.b16 %v890, %v889
    %v1064 = vpack.c.b16 %v892, %v891
    %v1065 = vpack.c.b16 %v894, %v893
    %v1066 = vpack.c.b16 %v896, %v895
    %v1067 = vpack.c.b16 %v898, %v897
    %v1068 = vpack.c.b16 %v900, %v899
    %v1069 = vpack.c.b16 %v902, %v901
    %v1070 = vpack.c.b16 %v904, %v903
    %v1071 = vpack.c.b16 %v906, %v905
    %v1072 = vpack.c.b16 %v908, %v907
    %v1073 = vpack.c.b16 %v910, %v909
    %v1074 = vpack.c.b16 %v912, %v911
    %v1075 = vpack.c.b16 %v914, %v913
    %v1076 = vpack.c.b16 %v916, %v915
    %v1077 = vpack.c.b16 %v918, %v917
    %v1078 = vpack.c.b16 %v920, %v919
    %v1079 = vpack.c.b16 %v922, %v921
    %v1080 = vpack.c.b16 %v924, %v923
    %v1081 = vpack.c.b16 %v926, %v925
    %v1082 = vpack.c.b16 %v928, %v927
    %v1083 = vpack.c.b16 %v930, %v929
    %v1084 = vpack.c.b16 %v932, %v931
    %v1085 = vpack.c.b16 %v934, %v933
    %v1086 = vpack.c.b16 %v936, %v935
    %v1087 = vpack.c.b16 %v938, %v937
    %v1088 = vpack.c.b16 %v940, %v939
    %v1089 = vpack.c.b16 %v942, %v941
    %v1090 = vpack.c.b16 %v944, %v943
    %v1091 = vpack.c.b16 %v946, %v945
    %v1092 = vpack.c.b16 %v948, %v947
    %1237 = vmatprep.subr.bf16.mxu0 0
    %1238 = vmatpush1.bf16.msra.mxu0 %v949
    %1239 = vmatprep.subr.bf16.mxu0 0
    %1240 = vmatpush1.bf16.msra.mxu0 %v950
    %1241 = vmatprep.subr.bf16.mxu0 0
    %1242 = vmatpush1.bf16.msra.mxu0 %v951
    %1243 = vmatprep.subr.bf16.mxu0 0
    %1244 = vmatpush1.bf16.msra.mxu0 %v952
    %1245 = vmatprep.subr.bf16.mxu0 0
    %1246 = vmatpush1.bf16.msra.mxu0 %v953
    %1247 = vmatprep.subr.bf16.mxu0 0
    %1248 = vmatpush1.bf16.msra.mxu0 %v954
    %1249 = vmatprep.subr.bf16.mxu0 0
    %1250 = vmatpush1.bf16.msra.mxu0 %v955
    %1251 = vmatprep.subr.bf16.mxu0 0
    %1252 = vmatpush1.bf16.msra.mxu0 %v956
    %1253 = vmatprep.subr.bf16.mxu0 0
    %1254 = vmatpush1.bf16.msra.mxu0 %v957
    %1255 = vmatprep.subr.bf16.mxu0 0
    %1256 = vmatpush1.bf16.msra.mxu0 %v958
    %1257 = vmatprep.subr.bf16.mxu0 0
    %1258 = vmatpush1.bf16.msra.mxu0 %v959
    %1259 = vmatprep.subr.bf16.mxu0 0
    %1260 = vmatpush1.bf16.msra.mxu0 %v960
    %1261 = vmatprep.subr.bf16.mxu0 0
    %1262 = vmatpush1.bf16.msra.mxu0 %v961
    %1263 = vmatprep.subr.bf16.mxu0 0
    %1264 = vmatpush1.bf16.msra.mxu0 %v962
    %1265 = vmatprep.subr.bf16.mxu0 0
    %1266 = vmatpush1.bf16.msra.mxu0 %v963
    %1267 = vmatprep.subr.bf16.mxu0 0
    %1268 = vmatpush1.bf16.msra.mxu0 %v964
    %1269 = vmatprep.mubr.bf16.mxu0 %v61
    %1270 = vmatmul.mubr.bf16.gmra.mrb[0].mxu0 %v60
    %v1271 = vpop.f32.mrb[0].mxu0
    %v1272 = vadd.f32 %v371, %v1271
    %v1273 = vpop.f32.mrb[0].mxu0
    %v1274 = vpop.f32.mrb[0].mxu0
    %v1275 = vpop.f32.mrb[0].mxu0
    %1276 = vdwg.mxu0
    %1277 = vmatprep.subr.bf16.mxu0 0
    %1278 = vmatpush1.bf16.msra.mxu0 %v965
    %1279 = vmatprep.subr.bf16.mxu0 0
    %1280 = vmatpush1.bf16.msra.mxu0 %v966
    %1281 = vmatprep.subr.bf16.mxu0 0
    %1282 = vmatpush1.bf16.msra.mxu0 %v967
    %1283 = vmatprep.subr.bf16.mxu0 0
    %1284 = vmatpush1.bf16.msra.mxu0 %v968
    %1285 = vmatprep.subr.bf16.mxu0 0
    %1286 = vmatpush1.bf16.msra.mxu0 %v969
    %1287 = vmatprep.subr.bf16.mxu0 0
    %1288 = vmatpush1.bf16.msra.mxu0 %v970
    %1289 = vmatprep.subr.bf16.mxu0 0
    %1290 = vmatpush1.bf16.msra.mxu0 %v971
    %1291 = vmatprep.subr.bf16.mxu0 0
    %1292 = vmatpush1.bf16.msra.mxu0 %v972
    %1293 = vmatprep.subr.bf16.mxu0 0
    %1294 = vmatpush1.bf16.msra.mxu0 %v973
    %1295 = vmatprep.subr.bf16.mxu0 0
    %1296 = vmatpush1.bf16.msra.mxu0 %v974
    %1297 = vmatprep.subr.bf16.mxu0 0
    %1298 = vmatpush1.bf16.msra.mxu0 %v975
    %1299 = vmatprep.subr.bf16.mxu0 0
    %1300 = vmatpush1.bf16.msra.mxu0 %v976
    %1301 = vmatprep.subr.bf16.mxu0 0
    %1302 = vmatpush1.bf16.msra.mxu0 %v977
    %1303 = vmatprep.subr.bf16.mxu0 0
    %1304 = vmatpush1.bf16.msra.mxu0 %v978
    %1305 = vmatprep.subr.bf16.mxu0 0
    %1306 = vmatpush1.bf16.msra.mxu0 %v979
    %1307 = vmatprep.subr.bf16.mxu0 0
    %1308 = vmatpush1.bf16.msra.mxu0 %v980
    %1309 = vmatprep.mubr.bf16.mxu0 %v63
    %1310 = vmatmul.mubr.bf16.gmra.mrb[0].mxu0 %v62
    %v1311 = vpop.f32.mrb[0].mxu0
    %v1312 = vadd.f32 %v1272, %v1311
    %v1313 = vpop.f32.mrb[0].mxu0
    %v1314 = vpop.f32.mrb[0].mxu0
    %v1315 = vpop.f32.mrb[0].mxu0
    %1316 = vdwg.mxu0
    %1317 = vmatprep.subr.bf16.mxu0 0
    %1318 = vmatpush1.bf16.msra.mxu0 %v981
    %1319 = vmatprep.subr.bf16.mxu0 0
    %1320 = vmatpush1.bf16.msra.mxu0 %v982
    %1321 = vmatprep.subr.bf16.mxu0 0
    %1322 = vmatpush1.bf16.msra.mxu0 %v983
    %1323 = vmatprep.subr.bf16.mxu0 0
    %1324 = vmatpush1.bf16.msra.mxu0 %v984
    %1325 = vmatprep.subr.bf16.mxu0 0
    %1326 = vmatpush1.bf16.msra.mxu0 %v985
    %1327 = vmatprep.subr.bf16.mxu0 0
    %1328 = vmatpush1.bf16.msra.mxu0 %v986
    %1329 = vmatprep.subr.bf16.mxu0 0
    %1330 = vmatpush1.bf16.msra.mxu0 %v987
    %1331 = vmatprep.subr.bf16.mxu0 0
    %1332 = vmatpush1.bf16.msra.mxu0 %v988
    %1333 = vmatprep.subr.bf16.mxu0 0
    %1334 = vmatpush1.bf16.msra.mxu0 %v989
    %1335 = vmatprep.subr.bf16.mxu0 0
    %1336 = vmatpush1.bf16.msra.mxu0 %v990
    %1337 = vmatprep.subr.bf16.mxu0 0
    %1338 = vmatpush1.bf16.msra.mxu0 %v991
    %1339 = vmatprep.subr.bf16.mxu0 0
    %1340 = vmatpush1.bf16.msra.mxu0 %v992
    %1341 = vmatprep.subr.bf16.mxu0 0
    %1342 = vmatpush1.bf16.msra.mxu0 %v993
    %1343 = vmatprep.subr.bf16.mxu0 0
    %1344 = vmatpush1.bf16.msra.mxu0 %v994
    %1345 = vmatprep.subr.bf16.mxu0 0
    %1346 = vmatpush1.bf16.msra.mxu0 %v995
    %1347 = vmatprep.subr.bf16.mxu0 0
    %1348 = vmatpush1.bf16.msra.mxu0 %v996
    %1349 = vmatprep.mubr.bf16.mxu0 %v65
    %1350 = vmatmul.mubr.bf16.gmra.mrb[0].mxu0 %v64
    %v1351 = vpop.f32.mrb[0].mxu0
    %v1352 = vadd.f32 %v1312, %v1351
    %v1353 = vpop.f32.mrb[0].mxu0
    %v1354 = vpop.f32.mrb[0].mxu0
    %v1355 = vpop.f32.mrb[0].mxu0
    %1356 = vdwg.mxu0
    %1357 = vmatprep.subr.bf16.mxu0 0
    %1358 = vmatpush1.bf16.msra.mxu0 %v997
    %1359 = vmatprep.subr.bf16.mxu0 0
    %1360 = vmatpush1.bf16.msra.mxu0 %v998
    %1361 = vmatprep.subr.bf16.mxu0 0
    %1362 = vmatpush1.bf16.msra.mxu0 %v999
    %1363 = vmatprep.subr.bf16.mxu0 0
    %1364 = vmatpush1.bf16.msra.mxu0 %v1000
    %1365 = vmatprep.subr.bf16.mxu0 0
    %1366 = vmatpush1.bf16.msra.mxu0 %v1001
    %1367 = vmatprep.subr.bf16.mxu0 0
    %1368 = vmatpush1.bf16.msra.mxu0 %v1002
    %1369 = vmatprep.subr.bf16.mxu0 0
    %1370 = vmatpush1.bf16.msra.mxu0 %v1003
    %1371 = vmatprep.subr.bf16.mxu0 0
    %1372 = vmatpush1.bf16.msra.mxu0 %v1004
    %1373 = vmatprep.subr.bf16.mxu0 0
    %1374 = vmatpush1.bf16.msra.mxu0 %v1005
    %1375 = vmatprep.subr.bf16.mxu0 0
    %1376 = vmatpush1.bf16.msra.mxu0 %v1006
    %1377 = vmatprep.subr.bf16.mxu0 0
    %1378 = vmatpush1.bf16.msra.mxu0 %v1007
    %1379 = vmatprep.subr.bf16.mxu0 0
    %1380 = vmatpush1.bf16.msra.mxu0 %v1008
    %1381 = vmatprep.subr.bf16.mxu0 0
    %1382 = vmatpush1.bf16.msra.mxu0 %v1009
    %1383 = vmatprep.subr.bf16.mxu0 0
    %1384 = vmatpush1.bf16.msra.mxu0 %v1010
    %1385 = vmatprep.subr.bf16.mxu0 0
    %1386 = vmatpush1.bf16.msra.mxu0 %v1011
    %1387 = vmatprep.subr.bf16.mxu0 0
    %1388 = vmatpush1.bf16.msra.mxu0 %v1012
    %1389 = vmatprep.mubr.bf16.mxu0 %v67
    %1390 = vmatmul.mubr.bf16.gmra.mrb[0].mxu0 %v66
    %v1391 = vpop.f32.mrb[0].mxu0
    %v1392 = vadd.f32 %v1352, %v1391
    %v1393 = vpop.f32.mrb[0].mxu0
    %v1394 = vpop.f32.mrb[0].mxu0
    %v1395 = vpop.f32.mrb[0].mxu0
    %1396 = vdwg.mxu0
    %1397 = vmatprep.subr.bf16.mxu0 0
    %1398 = vmatpush1.bf16.msra.mxu0 %v1013
    %1399 = vmatprep.subr.bf16.mxu0 0
    %1400 = vmatpush1.bf16.msra.mxu0 %v1014
    %1401 = vmatprep.subr.bf16.mxu0 0
    %1402 = vmatpush1.bf16.msra.mxu0 %v1015
    %1403 = vmatprep.subr.bf16.mxu0 0
    %1404 = vmatpush1.bf16.msra.mxu0 %v1016
    %1405 = vmatprep.subr.bf16.mxu0 0
    %1406 = vmatpush1.bf16.msra.mxu0 %v1017
    %1407 = vmatprep.subr.bf16.mxu0 0
    %1408 = vmatpush1.bf16.msra.mxu0 %v1018
    %1409 = vmatprep.subr.bf16.mxu0 0
    %1410 = vmatpush1.bf16.msra.mxu0 %v1019
    %1411 = vmatprep.subr.bf16.mxu0 0
    %1412 = vmatpush1.bf16.msra.mxu0 %v1020
    %1413 = vmatprep.subr.bf16.mxu0 0
    %1414 = vmatpush1.bf16.msra.mxu0 %v1021
    %1415 = vmatprep.subr.bf16.mxu0 0
    %1416 = vmatpush1.bf16.msra.mxu0 %v1022
    %1417 = vmatprep.subr.bf16.mxu0 0
    %1418 = vmatpush1.bf16.msra.mxu0 %v1023
    %1419 = vmatprep.subr.bf16.mxu0 0
    %1420 = vmatpush1.bf16.msra.mxu0 %v1024
    %1421 = vmatprep.subr.bf16.mxu0 0
    %1422 = vmatpush1.bf16.msra.mxu0 %v1025
    %1423 = vmatprep.subr.bf16.mxu0 0
    %1424 = vmatpush1.bf16.msra.mxu0 %v1026
    %1425 = vmatprep.subr.bf16.mxu0 0
    %1426 = vmatpush1.bf16.msra.mxu0 %v1027
    %1427 = vmatprep.subr.bf16.mxu0 0
    %1428 = vmatpush1.bf16.msra.mxu0 %v1028
    %1429 = vmatprep.mubr.bf16.mxu0 %v69
    %1430 = vmatmul.mubr.bf16.gmra.mrb[0].mxu0 %v68
    %v1431 = vpop.f32.mrb[0].mxu0
    %v1432 = vadd.f32 %v1392, %v1431
    %v1433 = vpop.f32.mrb[0].mxu0
    %v1434 = vpop.f32.mrb[0].mxu0
    %v1435 = vpop.f32.mrb[0].mxu0
    %1436 = vdwg.mxu0
    %1437 = vmatprep.subr.bf16.mxu0 0
    %1438 = vmatpush1.bf16.msra.mxu0 %v1029
    %1439 = vmatprep.subr.bf16.mxu0 0
    %1440 = vmatpush1.bf16.msra.mxu0 %v1030
    %1441 = vmatprep.subr.bf16.mxu0 0
    %1442 = vmatpush1.bf16.msra.mxu0 %v1031
    %1443 = vmatprep.subr.bf16.mxu0 0
    %1444 = vmatpush1.bf16.msra.mxu0 %v1032
    %1445 = vmatprep.subr.bf16.mxu0 0
    %1446 = vmatpush1.bf16.msra.mxu0 %v1033
    %1447 = vmatprep.subr.bf16.mxu0 0
    %1448 = vmatpush1.bf16.msra.mxu0 %v1034
    %1449 = vmatprep.subr.bf16.mxu0 0
    %1450 = vmatpush1.bf16.msra.mxu0 %v1035
    %1451 = vmatprep.subr.bf16.mxu0 0
    %1452 = vmatpush1.bf16.msra.mxu0 %v1036
    %1453 = vmatprep.subr.bf16.mxu0 0
    %1454 = vmatpush1.bf16.msra.mxu0 %v1037
    %1455 = vmatprep.subr.bf16.mxu0 0
    %1456 = vmatpush1.bf16.msra.mxu0 %v1038
    %1457 = vmatprep.subr.bf16.mxu0 0
    %1458 = vmatpush1.bf16.msra.mxu0 %v1039
    %1459 = vmatprep.subr.bf16.mxu0 0
    %1460 = vmatpush1.bf16.msra.mxu0 %v1040
    %1461 = vmatprep.subr.bf16.mxu0 0
    %1462 = vmatpush1.bf16.msra.mxu0 %v1041
    %1463 = vmatprep.subr.bf16.mxu0 0
    %1464 = vmatpush1.bf16.msra.mxu0 %v1042
    %1465 = vmatprep.subr.bf16.mxu0 0
    %1466 = vmatpush1.bf16.msra.mxu0 %v1043
    %1467 = vmatprep.subr.bf16.mxu0 0
    %1468 = vmatpush1.bf16.msra.mxu0 %v1044
    %1469 = vmatprep.mubr.bf16.mxu0 %v71
    %1470 = vmatmul.mubr.bf16.gmra.mrb[0].mxu0 %v70
    %v1471 = vpop.f32.mrb[0].mxu0
    %v1472 = vadd.f32 %v1432, %v1471
    %v1473 = vpop.f32.mrb[0].mxu0
    %v1474 = vpop.f32.mrb[0].mxu0
    %v1475 = vpop.f32.mrb[0].mxu0
    %1476 = vdwg.mxu0
    %1477 = vmatprep.subr.bf16.mxu0 0
    %1478 = vmatpush1.bf16.msra.mxu0 %v1045
    %1479 = vmatprep.subr.bf16.mxu0 0
    %1480 = vmatpush1.bf16.msra.mxu0 %v1046
    %1481 = vmatprep.subr.bf16.mxu0 0
    %1482 = vmatpush1.bf16.msra.mxu0 %v1047
    %1483 = vmatprep.subr.bf16.mxu0 0
    %1484 = vmatpush1.bf16.msra.mxu0 %v1048
    %1485 = vmatprep.subr.bf16.mxu0 0
    %1486 = vmatpush1.bf16.msra.mxu0 %v1049
    %1487 = vmatprep.subr.bf16.mxu0 0
    %1488 = vmatpush1.bf16.msra.mxu0 %v1050
    %1489 = vmatprep.subr.bf16.mxu0 0
    %1490 = vmatpush1.bf16.msra.mxu0 %v1051
    %1491 = vmatprep.subr.bf16.mxu0 0
    %1492 = vmatpush1.bf16.msra.mxu0 %v1052
    %1493 = vmatprep.subr.bf16.mxu0 0
    %1494 = vmatpush1.bf16.msra.mxu0 %v1053
    %1495 = vmatprep.subr.bf16.mxu0 0
    %1496 = vmatpush1.bf16.msra.mxu0 %v1054
    %1497 = vmatprep.subr.bf16.mxu0 0
    %1498 = vmatpush1.bf16.msra.mxu0 %v1055
    %1499 = vmatprep.subr.bf16.mxu0 0
    %1500 = vmatpush1.bf16.msra.mxu0 %v1056
    %1501 = vmatprep.subr.bf16.mxu0 0
    %1502 = vmatpush1.bf16.msra.mxu0 %v1057
    %1503 = vmatprep.subr.bf16.mxu0 0
    %1504 = vmatpush1.bf16.msra.mxu0 %v1058
    %1505 = vmatprep.subr.bf16.mxu0 0
    %1506 = vmatpush1.bf16.msra.mxu0 %v1059
    %1507 = vmatprep.subr.bf16.mxu0 0
    %1508 = vmatpush1.bf16.msra.mxu0 %v1060
    %1509 = vmatprep.mubr.bf16.mxu0 %v73
    %1510 = vmatmul.mubr.bf16.gmra.mrb[0].mxu0 %v72
    %v1511 = vpop.f32.mrb[0].mxu0
    %v1512 = vadd.f32 %v1472, %v1511
    %v1513 = vpop.f32.mrb[0].mxu0
    %v1514 = vpop.f32.mrb[0].mxu0
    %v1515 = vpop.f32.mrb[0].mxu0
    %1516 = vdwg.mxu0
    %1517 = vmatprep.subr.bf16.mxu0 0
    %1518 = vmatpush1.bf16.msra.mxu0 %v1061
    %1519 = vmatprep.subr.bf16.mxu0 0
    %1520 = vmatpush1.bf16.msra.mxu0 %v1062
    %1521 = vmatprep.subr.bf16.mxu0 0
    %1522 = vmatpush1.bf16.msra.mxu0 %v1063
    %1523 = vmatprep.subr.bf16.mxu0 0
    %1524 = vmatpush1.bf16.msra.mxu0 %v1064
    %1525 = vmatprep.subr.bf16.mxu0 0
    %1526 = vmatpush1.bf16.msra.mxu0 %v1065
    %1527 = vmatprep.subr.bf16.mxu0 0
    %1528 = vmatpush1.bf16.msra.mxu0 %v1066
    %1529 = vmatprep.subr.bf16.mxu0 0
    %1530 = vmatpush1.bf16.msra.mxu0 %v1067
    %1531 = vmatprep.subr.bf16.mxu0 0
    %1532 = vmatpush1.bf16.msra.mxu0 %v1068
    %1533 = vmatprep.subr.bf16.mxu0 0
    %1534 = vmatpush1.bf16.msra.mxu0 %v1069
    %1535 = vmatprep.subr.bf16.mxu0 0
    %1536 = vmatpush1.bf16.msra.mxu0 %v1070
    %1537 = vmatprep.subr.bf16.mxu0 0
    %1538 = vmatpush1.bf16.msra.mxu0 %v1071
    %1539 = vmatprep.subr.bf16.mxu0 0
    %1540 = vmatpush1.bf16.msra.mxu0 %v1072
    %1541 = vmatprep.subr.bf16.mxu0 0
    %1542 = vmatpush1.bf16.msra.mxu0 %v1073
    %1543 = vmatprep.subr.bf16.mxu0 0
    %1544 = vmatpush1.bf16.msra.mxu0 %v1074
    %1545 = vmatprep.subr.bf16.mxu0 0
    %1546 = vmatpush1.bf16.msra.mxu0 %v1075
    %1547 = vmatprep.subr.bf16.mxu0 0
    %1548 = vmatpush1.bf16.msra.mxu0 %v1076
    %1549 = vmatprep.mubr.bf16.mxu0 %v75
    %1550 = vmatmul.mubr.bf16.gmra.mrb[0].mxu0 %v74
    %v1551 = vpop.f32.mrb[0].mxu0
    %v1552 = vadd.f32 %v1512, %v1551
    %v1553 = vpop.f32.mrb[0].mxu0
    %v1554 = vpop.f32.mrb[0].mxu0
    %v1555 = vpop.f32.mrb[0].mxu0
    %1556 = vdwg.mxu0
    %1557 = vmatprep.subr.bf16.mxu0 0
    %1558 = vmatpush1.bf16.msra.mxu0 %v1077
    %1559 = vmatprep.subr.bf16.mxu0 0
    %1560 = vmatpush1.bf16.msra.mxu0 %v1078
    %1561 = vmatprep.subr.bf16.mxu0 0
    %1562 = vmatpush1.bf16.msra.mxu0 %v1079
    %1563 = vmatprep.subr.bf16.mxu0 0
    %1564 = vmatpush1.bf16.msra.mxu0 %v1080
    %1565 = vmatprep.subr.bf16.mxu0 0
    %1566 = vmatpush1.bf16.msra.mxu0 %v1081
    %1567 = vmatprep.subr.bf16.mxu0 0
    %1568 = vmatpush1.bf16.msra.mxu0 %v1082
    %1569 = vmatprep.subr.bf16.mxu0 0
    %1570 = vmatpush1.bf16.msra.mxu0 %v1083
    %1571 = vmatprep.subr.bf16.mxu0 0
    %1572 = vmatpush1.bf16.msra.mxu0 %v1084
    %1573 = vmatprep.subr.bf16.mxu0 0
    %1574 = vmatpush1.bf16.msra.mxu0 %v1085
    %1575 = vmatprep.subr.bf16.mxu0 0
    %1576 = vmatpush1.bf16.msra.mxu0 %v1086
    %1577 = vmatprep.subr.bf16.mxu0 0
    %1578 = vmatpush1.bf16.msra.mxu0 %v1087
    %1579 = vmatprep.subr.bf16.mxu0 0
    %1580 = vmatpush1.bf16.msra.mxu0 %v1088
    %1581 = vmatprep.subr.bf16.mxu0 0
    %1582 = vmatpush1.bf16.msra.mxu0 %v1089
    %1583 = vmatprep.subr.bf16.mxu0 0
    %1584 = vmatpush1.bf16.msra.mxu0 %v1090
    %1585 = vmatprep.subr.bf16.mxu0 0
    %1586 = vmatpush1.bf16.msra.mxu0 %v1091
    %1587 = vmatprep.subr.bf16.mxu0 0
    %1588 = vmatpush1.bf16.msra.mxu0 %v1092
    %1589 = vmatprep.mubr.bf16.mxu0 %v77
    %1590 = vmatmul.mubr.bf16.gmra.mrb[0].mxu0 %v76
    %v1591 = vpop.f32.mrb[0].mxu0
    %v1592 = vadd.f32 %v1552, %v1591
    %v1593 = vpop.f32.mrb[0].mxu0
    %v1594 = vpop.f32.mrb[0].mxu0
    %v1595 = vpop.f32.mrb[0].mxu0
    %1596 = vdwg.mxu0
    %1597 = vst [vmem:[#allocation7] sm:$0xff] %v1592
    // Predicated region
    $region22: #{inverse_model_pallas.1} parent=1 // pred_check
      _
    $region23: #{inverse_model_pallas.1} parent=1 // pred_check_branch
      %1599 = sbr.rel (0) target = $region25
    $region24: #{inverse_model_pallas.1} parent=1 // pred_region
      %s1601 = ssub.s32 128, 128
      %1602 = vsyncadd [#allocation4], %s1601
      %s1604 = sshll.u32 [#allocation7], 4
      %s1605 = int_to_ptr.vmem [resolvable:$true] %s1604
      %1607 = dma.vmem_to_hbm [thread:$0]  %s1605, 128, %s3, [#allocation4]
    $region25: #{inverse_model_pallas.1} parent=1 // pred_fallthru
      _
    // Predicated region
    $region26: #{inverse_model_pallas.1} parent=1 // pred_check
      _
    $region27: #{inverse_model_pallas.1} parent=1 // pred_check_branch
      %1609 = sbr.rel (0) target = $region29
    $region28: #{inverse_model_pallas.1} parent=1 // pred_region
      %1610 = dma.done [#allocation4], 128
    $region29: #{inverse_model_pallas.1} parent=1 // pred_fallthru
      _
    %1611 = vsyncpa [#allocation3], 1
    %1612 = vsyncpa [#allocation6], 1
    %1613 = vsyncpa [#allocation4], 1

</llo_original>
